<compile_context>
chip_gen: v7x
topology: tpu7x:2x2x1
jax: 0.10.0
libtpu: 0.0.40
codegen_flags: <defaults>
</compile_context>

<pallas_src>
import functools

import jax
import jax.numpy as jnp
from jax.experimental import pallas as pl
from jax.experimental.pallas import tpu as pltpu


def _round_up(x, m):
    return (x + m - 1) // m * m


# ----------------------------- Pallas kernel -----------------------------

def _fused_actor_kernel(pT_ref, wcT_ref, bc_ref, wp_ref, bp_ref, o_ref,
                        *, tb, n_oc, ohw_pad, act_limit):
    """Fused conv-as-matmul + ReLU -> (flatten folded into weights) head + Tanh.

    pT_ref  : [CK, tb*OHW_pad]      bf16  im2col patches, positions on lanes,
                                          batch-major, zero-padded to 128
    wcT_ref : [OC, CK]              bf16  conv weight (PyTorch layout, flat)
    bc_ref  : [OC, 1]               f32   conv bias
    wp_ref  : [OC, OHW_pad, A_pad]  bf16  pi weight with the NCHW flatten folded
                                          in (zero rows at padded positions,
                                          zero cols past act_dim)
    bp_ref  : [1, A_pad]            f32   pi bias (zero-padded)
    o_ref   : [tb, A_pad]           f32   padded actions for this batch tile
    """
    # Conv as one lane-dense 2-D MXU matmul:
    #   conv[oc, t*OHW_pad + p] = sum_k wcT[oc, k] * pT[k, t*OHW_pad + p]
    conv = jnp.dot(wcT_ref[...], pT_ref[...], preferred_element_type=jnp.float32)
    conv = jnp.maximum(conv + bc_ref[...], 0.0)                  # bias + ReLU (f32)

    # Split the lane axis at the 128-aligned per-sample boundary (one whole-vreg
    # relayout; OHW_pad % 128 == 0) and cast once for the head matmul.
    conv3 = conv.reshape(n_oc, tb, ohw_pad).astype(jnp.bfloat16)  # [OC, tb, OHW_pad]

    # pi head with the PyTorch NCHW flatten folded into wp:
    #   act[t, a] = sum_oc sum_p conv3[oc, t, p] * wp[oc, p, a]
    # expressed as an OC-batched matmul (Mosaic-friendly) + reduction over OC
    # instead of a two-contracting-dim dot_general.
    part = jnp.einsum("otp,opa->ota", conv3, wp_ref[...],
                      preferred_element_type=jnp.float32)         # [OC, tb, A_pad]
    act = part.sum(axis=0) + bp_ref[...]                          # [tb, A_pad]
    o_ref[...] = (act_limit * jnp.tanh(act)).astype(o_ref.dtype)


# ----------------------------- glue (plain JAX) -----------------------------

def _im2col_T_nchw(x, kh, kw, stride, pad, ohw_pad):
    """x: [B, C, H, W] -> transposed patches [C*kh*kw, B*OHW_pad].

    Row index    = c*kh*kw + ki*kw + kj   (matches conv_w.reshape(OC, C*kh*kw))
    Column index = b*OHW_pad + oh*OW + ow (batch-major; positions zero-padded
                                           up to the 128-lane multiple OHW_pad)
    obs is transposed to channel-major BEFORE the 9x expansion, so the expanded
    tensor is built directly in its final order (no big post-stack transpose).
    """
    B, C, H, W = x.shape
    OH = (H + 2 * pad - kh) // stride + 1
    OW = (W + 2 * pad - kw) // stride + 1
    xc = jnp.transpose(x, (1, 0, 2, 3))                            # [C, B, H, W] (cheap)
    xp = jnp.pad(xc, ((0, 0), (0, 0), (pad, pad), (pad, pad)))
    cols = []
    for i in range(kh):
        for j in range(kw):
            cols.append(xp[:, :, i:i + stride * OH:stride, j:j + stride * OW:stride])
    patches = jnp.stack(cols, axis=1)                              # [C, kh*kw, B, OH, OW]
    patches = patches.reshape(C * kh * kw, B, OH * OW)
    if ohw_pad != OH * OW:
        patches = jnp.pad(patches, ((0, 0), (0, 0), (0, ohw_pad - OH * OW)))
    return patches.reshape(C * kh * kw, B * ohw_pad), OH, OW


def init_params(key, in_channels, conv_out_channels, feat_dim, act_dim):
    """Parameters in native PyTorch layouts."""
    k1, k2, k3, k4 = jax.random.split(key, 4)
    return {
        # cnn_net: Conv2d(in_channels -> conv_out_channels, 3x3, stride 2, pad 1)
        "conv_w": 0.1 * jax.random.normal(k1, (conv_out_channels, in_channels, 3, 3), jnp.float32),
        "conv_b": 0.1 * jax.random.normal(k2, (conv_out_channels,), jnp.float32),
        # pi: Linear(feat_dim -> act_dim), PyTorch [out, in]
        "pi_w": 0.1 * jax.random.normal(k3, (act_dim, feat_dim), jnp.float32),
        "pi_b": 0.1 * jax.random.normal(k4, (act_dim,), jnp.float32),
    }


def prepare_params(torch_params, oh, ow, a_pad=128):
    """One-time layout / dtype / padding prep so the forward is one fused kernel.

    The PyTorch NCHW Flatten and both paddings (positions -> OHW_pad lanes,
    act_dim -> A_pad output lanes) are folded into the pi weight here, at zero
    per-step kernel cost.
    """
    OC, C, KH, KW = torch_params["conv_w"].shape
    A, F = torch_params["pi_w"].shape
    ohw = oh * ow
    ohw_pad = _round_up(ohw, 128)
    assert F == OC * ohw, "pi weight feature dim must match conv output"
    assert A <= a_pad
    wp = torch_params["pi_w"].reshape(A, OC, ohw)                       # [A, OC, OHW]
    wp = jnp.pad(wp, ((0, a_pad - A), (0, 0), (0, ohw_pad - ohw)))      # [A_pad, OC, OHW_pad]
    return {
        "wcT": torch_params["conv_w"].reshape(OC, C * KH * KW).astype(jnp.bfloat16),
        "bc": torch_params["conv_b"].reshape(OC, 1).astype(jnp.float32),
        "wp3": jnp.transpose(wp, (1, 2, 0)).astype(jnp.bfloat16),       # [OC, OHW_pad, A_pad]
        "bp": jnp.pad(torch_params["pi_b"], (0, a_pad - A)).reshape(1, a_pad).astype(jnp.float32),
    }


def _pick_batch_tile(B, ck, ohw_pad, n_oc, a_pad, vmem_budget=8 << 20):
    """Largest batch tile fitting a conservative VMEM budget, keeping >= 2 grid
    steps when the batch allows (so the 'parallel' axis feeds both v7x TCs)."""
    f_pad = n_oc * ohw_pad

    def fits(tb):
        patch = 2 * ck * tb * ohw_pad * 2          # double-buffered bf16 input block
        outb = 2 * tb * a_pad * 4                  # double-buffered f32 output block
        inter = 3 * tb * f_pad * 4                 # conv / conv3 / partial sums (f32), rough
        return patch + outb + inter <= vmem_budget

    for tb in (512, 256, 128, 64, 32, 16, 8):
        if B % tb == 0 and B // tb >= 2 and fits(tb):
            return tb
    # Tiny or oddly-shaped batches: whole batch in one step (always legal).
    # TODO(synk): grid masking for huge batches not divisible by 8.
    return B


def mlp_actor_forward(params, obs, *, act_dim, act_limit):
    """obs: [B, C, H, W] float32 (NCHW).  Returns actions [B, act_dim] float32."""
    B, C, H, W = obs.shape
    OC, CK = params["wcT"].shape
    OC_w, ohw_pad, A_pad = params["wp3"].shape
    assert OC_w == OC

    patchesT, OH, OW = _im2col_T_nchw(obs, kh=3, kw=3, stride=2, pad=1, ohw_pad=ohw_pad)
    assert _round_up(OH * OW, 128) == ohw_pad
    patchesT = patchesT.astype(jnp.bfloat16)       # halve HBM bytes of the dominant tensor

    tb = _pick_batch_tile(B, CK, ohw_pad, OC, A_pad)
    grid = (B // tb,)

    kernel = functools.partial(_fused_actor_kernel, tb=tb, n_oc=OC,
                               ohw_pad=ohw_pad, act_limit=float(act_limit))

    out = pl.pallas_call(
        kernel,
        out_shape=jax.ShapeDtypeStruct((B, A_pad), jnp.float32),
        grid=grid,
        in_specs=[
            pl.BlockSpec((CK, tb * ohw_pad), lambda i: (0, i)),       # patches (batch tile on lanes)
            pl.BlockSpec((OC, CK), lambda i: (0, 0)),                 # conv weight (VMEM resident)
            pl.BlockSpec((OC, 1), lambda i: (0, 0)),                  # conv bias
            pl.BlockSpec((OC, ohw_pad, A_pad), lambda i: (0, 0, 0)),  # pi weight (VMEM resident)
            pl.BlockSpec((1, A_pad), lambda i: (0, 0)),               # pi bias
        ],
        out_specs=pl.BlockSpec((tb, A_pad), lambda i: (i, 0)),        # lane-dense padded output
        compiler_params=pltpu.CompilerParams(
            dimension_semantics=("parallel",),       # batch tiles -> both TCs on v7x
            vmem_limit_bytes=32 * 1024 * 1024),
    )(patchesT, params["wcT"], params["bc"], params["wp3"], params["bp"])

    return out[:, :act_dim]                          # drop the zero-padded action lanes


# ----------------------------- reference (pure JAX) -----------------------------

def _reference_forward(torch_params, obs, act_limit):
    conv = jax.lax.conv_general_dilated(
        obs, torch_params["conv_w"], window_strides=(2, 2), padding=((1, 1), (1, 1)),
        dimension_numbers=("NCHW", "OIHW", "NCHW"))
    conv = jnp.maximum(conv + torch_params["conv_b"][None, :, None, None], 0.0)
    feat = conv.reshape(conv.shape[0], -1)                           # NCHW flatten
    act = feat @ torch_params["pi_w"].T + torch_params["pi_b"]
    return act_limit * jnp.tanh(act)


# ----------------------------- main -----------------------------

if __name__ == "__main__":
    key = jax.random.PRNGKey(0)
    k_obs, k_params = jax.random.split(key)

    B, C, H, W = 2, 4, 16, 16
    act_dim = 3
    act_limit = 1.0
    conv_oc = 8
    OH = OW = H // 2                      # conv: k=3, s=2, p=1
    feat_dim = conv_oc * OH * OW          # 8 * 8 * 8 = 512

    obs = jax.random.uniform(k_obs, (B, C, H, W), jnp.float32)
    torch_params = init_params(k_params, C, conv_oc, feat_dim, act_dim)
    params = prepare_params(torch_params, oh=OH, ow=OW)   # one-time layout / bf16 / padding prep

    fwd = jax.jit(functools.partial(mlp_actor_forward, act_dim=act_dim, act_limit=act_limit))
    actions = fwd(params, obs)
    jax.block_until_ready(actions)

    assert actions.shape == (B, act_dim)
    assert bool(jnp.all(jnp.abs(actions) <= act_limit + 1e-6))

    # sanity check vs. independent XLA reference (bf16 MXU inputs -> loose tol)
    ref = _reference_forward(torch_params, obs, act_limit)
    assert bool(jnp.allclose(actions, ref, atol=5e-2, rtol=5e-2)), (actions, ref)

    print("KERNEL_OK")
</pallas_src>

<mosaic_0001>
module attributes {stable_mosaic.version = 11 : i64} {
  func.func @_fused_actor_kernel(%arg0: i32, %arg1: memref<36x256xbf16, #tpu.memory_space<vmem>>, %arg2: memref<8x36xbf16, #tpu.memory_space<vmem>>, %arg3: memref<8x1xf32, #tpu.memory_space<vmem>>, %arg4: memref<8x128x128xbf16, #tpu.memory_space<vmem>>, %arg5: memref<1x128xf32, #tpu.memory_space<vmem>>, %arg6: memref<2x128xf32, #tpu.memory_space<vmem>>) attributes {dimension_semantics = [#tpu.dimension_semantics<parallel>], iteration_bounds = array<i64: 1>, scalar_prefetch = 0 : i64, scratch_operands = 0 : i64, tpu.core_type = #tpu.core_type<tc>, window_params = [{transform_indices = @transform_0, window_bounds = array<i64: 36, 256>}, {pipeline_mode = #tpu.pipeline_mode<synchronous>, transform_indices = @transform_1, window_bounds = array<i64: 8, 36>}, {pipeline_mode = #tpu.pipeline_mode<synchronous>, transform_indices = @transform_2, window_bounds = array<i64: 8, 1>}, {pipeline_mode = #tpu.pipeline_mode<synchronous>, transform_indices = @transform_3, window_bounds = array<i64: 8, 128, 128>}, {pipeline_mode = #tpu.pipeline_mode<synchronous>, transform_indices = @transform_4, window_bounds = array<i64: 1, 128>}, {transform_indices = @transform_5, window_bounds = array<i64: 2, 128>}]} {
    %c0 = arith.constant 0 : index
    %c0_0 = arith.constant 0 : index
    %0 = vector.load %arg2[%c0, %c0_0] : memref<8x36xbf16, #tpu.memory_space<vmem>>, vector<8x36xbf16>
    %c0_1 = arith.constant 0 : index
    %c0_2 = arith.constant 0 : index
    %1 = vector.load %arg1[%c0_1, %c0_2] : memref<36x256xbf16, #tpu.memory_space<vmem>>, vector<36x256xbf16>
    %cst = arith.constant dense<0.000000e+00> : vector<8x256xf32>
    %2 = tpu.matmul %0, %1, %cst {dimension_numbers = #tpu.dot_dimension_numbers<[1], [0], [0], [1], [0, 0, 1, 1], [], []>} : vector<8x36xbf16>, vector<36x256xbf16>, vector<8x256xf32> -> vector<8x256xf32>
    %c0_3 = arith.constant 0 : index
    %c0_4 = arith.constant 0 : index
    %3 = vector.load %arg3[%c0_3, %c0_4] : memref<8x1xf32, #tpu.memory_space<vmem>>, vector<8x1xf32>
    %4 = vector.broadcast %3 : vector<8x1xf32> to vector<8x256xf32>
    %5 = arith.addf %2, %4 : vector<8x256xf32>
    %cst_5 = arith.constant 0.000000e+00 : f32
    %6 = vector.broadcast %cst_5 : f32 to vector<8x256xf32>
    %7 = arith.maximumf %5, %6 : vector<8x256xf32>
    %8 = vector.shape_cast %7 : vector<8x256xf32> to vector<8x2x128xf32>
    %9 = arith.truncf %8 : vector<8x2x128xf32> to vector<8x2x128xbf16>
    %c0_6 = arith.constant 0 : index
    %c0_7 = arith.constant 0 : index
    %c0_8 = arith.constant 0 : index
    %10 = vector.load %arg4[%c0_6, %c0_7, %c0_8] : memref<8x128x128xbf16, #tpu.memory_space<vmem>>, vector<8x128x128xbf16>
    "tpu.trace_start"() <{level = 10 : i32, message = "otp,opa->ota"}> : () -> ()
    %cst_9 = arith.constant dense<0.000000e+00> : vector<8x2x128xf32>
    %11 = tpu.matmul %9, %10, %cst_9 {dimension_numbers = #tpu.dot_dimension_numbers<[2], [1], [1], [2], [0, 0, 0, 1, 1, 2], [0], [0]>} : vector<8x2x128xbf16>, vector<8x128x128xbf16>, vector<8x2x128xf32> -> vector<8x2x128xf32>
    "tpu.trace_stop"() : () -> ()
    %cst_10 = arith.constant dense<0.000000e+00> : vector<2x128xf32>
    %12 = vector.multi_reduction <add>, %11, %cst_10 [0] : vector<8x2x128xf32> to vector<2x128xf32>
    %c0_11 = arith.constant 0 : index
    %c0_12 = arith.constant 0 : index
    %13 = vector.load %arg5[%c0_11, %c0_12] : memref<1x128xf32, #tpu.memory_space<vmem>>, vector<1x128xf32>
    %14 = vector.broadcast %13 : vector<1x128xf32> to vector<2x128xf32>
    %15 = arith.addf %12, %14 : vector<2x128xf32>
    %16 = math.tanh %15 : vector<2x128xf32>
    %cst_13 = arith.constant 1.000000e+00 : f32
    %17 = vector.broadcast %cst_13 : f32 to vector<2x128xf32>
    %18 = arith.mulf %17, %16 : vector<2x128xf32>
    %c0_14 = arith.constant 0 : index
    %c0_15 = arith.constant 0 : index
    %19 = vector.load %arg6[%c0_14, %c0_15] : memref<2x128xf32, #tpu.memory_space<vmem>>, vector<2x128xf32>
    tpu.vector_store %arg6[%c0_14, %c0_15], %18 {strides = array<i32>} : memref<2x128xf32, #tpu.memory_space<vmem>>, vector<2x128xf32>,
    return
  }
  func.func @transform_0(%arg0: i32) -> (i32, i32) {
    %c0_i32 = arith.constant 0 : i32
    %c0_i32_0 = arith.constant 0 : i32
    return %c0_i32, %arg0 : i32, i32
  }
  func.func @transform_1(%arg0: i32) -> (i32, i32) {
    %c0_i32 = arith.constant 0 : i32
    %c0_i32_0 = arith.constant 0 : i32
    %c0_i32_1 = arith.constant 0 : i32
    return %c0_i32, %c0_i32_0 : i32, i32
  }
  func.func @transform_2(%arg0: i32) -> (i32, i32) {
    %c0_i32 = arith.constant 0 : i32
    %c0_i32_0 = arith.constant 0 : i32
    %c0_i32_1 = arith.constant 0 : i32
    return %c0_i32, %c0_i32_0 : i32, i32
  }
  func.func @transform_3(%arg0: i32) -> (i32, i32, i32) {
    %c0_i32 = arith.constant 0 : i32
    %c0_i32_0 = arith.constant 0 : i32
    %c0_i32_1 = arith.constant 0 : i32
    %c0_i32_2 = arith.constant 0 : i32
    return %c0_i32, %c0_i32_0, %c0_i32_1 : i32, i32, i32
  }
  func.func @transform_4(%arg0: i32) -> (i32, i32) {
    %c0_i32 = arith.constant 0 : i32
    %c0_i32_0 = arith.constant 0 : i32
    %c0_i32_1 = arith.constant 0 : i32
    return %c0_i32, %c0_i32_0 : i32, i32
  }
  func.func @transform_5(%arg0: i32) -> (i32, i32) {
    %c0_i32 = arith.constant 0 : i32
    %c0_i32_0 = arith.constant 0 : i32
    return %arg0, %c0_i32 : i32, i32
  }
}

</mosaic_0001>

<llo_original>
// kernel: mlp_actor_forward.1
$region0: #{mlp_actor_forward.1}
  #allocation0 [shape = 'u32[]', space=smem, size = 0x4, offset = 0x4, fixed_abs, tag = 'smem constant byte address 0x4 - core index']
  #allocation1 [shape = 'u32[144,128]{1,0:T(1,128)}', space=vmem, size = 0x12000, scoped, tag = 'internal scratch']
  %s0 = inlined_call_operand.vmem [shape: bf16[36,256], index: 0, kind: input, shape index: {}]
  %s1 = inlined_call_operand.vmem [shape: bf16[8,36], index: 1, kind: input, shape index: {}]
  %s2 = inlined_call_operand.vmem [shape: f32[8,1], index: 2, kind: input, shape index: {}]
  %s3 = inlined_call_operand.vmem [shape: bf16[8,128,128], index: 3, kind: input, shape index: {}]
  %s4 = inlined_call_operand.vmem [shape: f32[1,128], index: 4, kind: input, shape index: {}]
  %s5 = inlined_call_operand.hbm [shape: f32[2,128], index: 5, kind: output, shape index: {}]
  %s6 = sld [smem:[#allocation0]]
  $region30: #{mlp_actor_forward.1} parent=0
    _
  %s8 = ssub.s32 1, %s6
  %s9 = scalar_select 0, %s8, %s6
  $region1: #{mlp_actor_forward.1} parent=0
    #allocation2 [shape = 'u8[1024]{0}', space=vmem, size = 0x400, scoped, tag = 'output window, operand 0, single buffered']
    #allocation3 [shape = 's32[1]{0}', space=sflag, size = 0x4, scoped, tag = 'scoped memory for mlp_actor_forward.1']
    %10 = vsyncpa [#allocation3], 0
    // Predicated region
    $region2: #{mlp_actor_forward.1} parent=1 // pred_check
      _
    $region3: #{mlp_actor_forward.1} parent=1 // pred_check_branch
      %12 = sbr.rel (0) target = $region5
    $region4: #{mlp_actor_forward.1} parent=1 // pred_region
      _
    $region5: #{mlp_actor_forward.1} parent=1 // pred_fallthru
      _
    // Predicated region
    $region6: #{mlp_actor_forward.1} parent=1 // pred_check
      _
    $region7: #{mlp_actor_forward.1} parent=1 // pred_check_branch
      %14 = sbr.rel (0) target = $region9
    $region8: #{mlp_actor_forward.1} parent=1 // pred_region
      _
    $region9: #{mlp_actor_forward.1} parent=1 // pred_fallthru
      _
    // Predicated region
    $region10: #{mlp_actor_forward.1} parent=1 // pred_check
      _
    $region11: #{mlp_actor_forward.1} parent=1 // pred_check_branch
      %16 = sbr.rel (0) target = $region13
    $region12: #{mlp_actor_forward.1} parent=1 // pred_region
      _
    $region13: #{mlp_actor_forward.1} parent=1 // pred_fallthru
      _
    // Predicated region
    $region14: #{mlp_actor_forward.1} parent=1 // pred_check
      _
    $region15: #{mlp_actor_forward.1} parent=1 // pred_check_branch
      %18 = sbr.rel (0) target = $region17
    $region16: #{mlp_actor_forward.1} parent=1 // pred_region
      _
    $region17: #{mlp_actor_forward.1} parent=1 // pred_fallthru
      _
    // Predicated region
    $region18: #{mlp_actor_forward.1} parent=1 // pred_check
      _
    $region19: #{mlp_actor_forward.1} parent=1 // pred_check_branch
      %20 = sbr.rel (0) target = $region21
    $region20: #{mlp_actor_forward.1} parent=1 // pred_region
      _
    $region21: #{mlp_actor_forward.1} parent=1 // pred_fallthru
      _
    %v22 = vld [vmem:[%s1] sm:$0xf]
    %v23 = vld [vmem:[%s0] sm:$0xff]
    %v24 = vld [vmem:[%s0 + $0x8] sm:$0xff]
    %v25 = vld [vmem:[%s0 + $0x10] sm:$0xff]
    %v26 = vld [vmem:[%s0 + $0x18] sm:$0xff]
    %v27 = vld [vmem:[%s0 + $0x20] sm:$0x33]
    %v28 = vld [vmem:[%s2] sm:$0xff]
    %30 = vset.pattern.permute.xlu0 0
    %31 = vperm.xlu0 %30, %v28
    %v32 = vpop.permute.xlu0 %31
    %v39 = vunpack.c.l.b16 %v23
    %v40 = vunpack.c.h.b16 %v23
    %v41 = vunpack.c.l.b16 %v24
    %v42 = vunpack.c.h.b16 %v24
    %v43 = vunpack.c.l.b16 %v25
    %v44 = vunpack.c.h.b16 %v25
    %v45 = vunpack.c.l.b16 %v26
    %v46 = vunpack.c.h.b16 %v26
    %v47 = vunpack.c.l.b16 %v27
    %v48 = vunpack.c.h.b16 %v27
    %v49 = vpack.c.b16 %v41, %v39
    %v50 = vpack.c.b16 %v42, %v40
    %v51 = vpack.c.b16 %v45, %v43
    %v52 = vpack.c.b16 %v46, %v44
    %v53 = vpack.c.b16 %v47, %v47
    %v54 = vpack.c.b16 %v48, %v48
    %vm59 = vcmask 293888
    %v61 = vsel %vm59, %v22, 0
    %vm63 = vcmask 1041408
    %v65 = vsel %vm63, %v53, 0
    %v68 = vsel %vm63, %v54, 0
    %70 = vmatprep.subr.bf16.mxu0 %v50
    %71 = vmatpush1.bf16.msra.mxu0 %v49
    %72 = vmatprep.subr.bf16.mxu0 %v52
    %73 = vmatpush1.bf16.msra.mxu0 %v51
    %74 = vmatprep.subr.bf16.mxu0 %v68
    %75 = vmatpush1.bf16.msra.mxu0 %v65
    %76 = vmatprep.subr.bf16.mxu0 0
    %77 = vmatpush1.bf16.msra.mxu0 0
    %78 = vmatprep.subr.bf16.mxu0 0
    %79 = vmatpush1.bf16.msra.mxu0 0
    %80 = vmatprep.subr.bf16.mxu0 0
    %81 = vmatpush1.bf16.msra.mxu0 0
    %82 = vmatprep.subr.bf16.mxu0 0
    %83 = vmatpush1.bf16.msra.mxu0 0
    %84 = vmatprep.subr.bf16.mxu0 0
    %85 = vmatpush1.bf16.msra.mxu0 0
    %86 = vmatprep.subr.bf16.mxu0 0
    %87 = vmatpush1.bf16.msra.mxu0 0
    %88 = vmatprep.subr.bf16.mxu0 0
    %89 = vmatpush1.bf16.msra.mxu0 0
    %90 = vmatprep.subr.bf16.mxu0 0
    %91 = vmatpush1.bf16.msra.mxu0 0
    %92 = vmatprep.subr.bf16.mxu0 0
    %93 = vmatpush1.bf16.msra.mxu0 0
    %94 = vmatprep.subr.bf16.mxu0 0
    %95 = vmatpush1.bf16.msra.mxu0 0
    %96 = vmatprep.subr.bf16.mxu0 0
    %97 = vmatpush1.bf16.msra.mxu0 0
    %98 = vmatprep.subr.bf16.mxu0 0
    %99 = vmatpush1.bf16.msra.mxu0 0
    %100 = vmatprep.subr.bf16.mxu0 0
    %101 = vmatpush1.bf16.msra.mxu0 0
    %102 = vmatprep.mubr.bf16.mxu0 0
    %103 = vmatmul.mubr.bf16.gmra.mrb[0].mxu0 %v61
    %v104 = vpop.f32.mrb[0].mxu0
    %v105 = vadd.f32 %v32, %v104
    %v106 = vpop.f32.mrb[0].mxu0
    %v107 = vadd.f32 %v32, %v106
    %v108 = vpop.f32.mrb[0].mxu0
    %v109 = vpop.f32.mrb[0].mxu0
    %110 = vdwg.mxu0
    %v111 = vmax.f32 %v105, 0.0
    %v112 = vmax.f32 %v107, 0.0
    %v113 = vcombine.high %v111, 0.0
    %v115 = vunpack.c.l.s4 1983009808
    %v116 = vunpack.c.0.s8 %v115
    %v117 = vlaneseq
    %v118 = vshrl.u32 %v117, 7
    %v119 = vsub.s32 %v116, %v118
    %v120 = vrot.slane %v111, %v119
    %v122 = vunpack.c.l.s4 1983009808
    %v123 = vunpack.c.0.s8 %v122
    %v124 = vlaneseq
    %v125 = vshrl.u32 %v124, 7
    %v126 = vsub.s32 %v123, %v125
    %v127 = vrot.slane %v113, %v126
    %v128 = vcombine.high %v112, 0.0
    %v130 = vunpack.c.l.s4 1983009808
    %v131 = vunpack.c.0.s8 %v130
    %v132 = vlaneseq
    %v133 = vshrl.u32 %v132, 7
    %v134 = vsub.s32 %v131, %v133
    %v135 = vrot.slane %v112, %v134
    %v137 = vunpack.c.l.s4 1983009808
    %v138 = vunpack.c.0.s8 %v137
    %v139 = vlaneseq
    %v140 = vshrl.u32 %v139, 7
    %v141 = vsub.s32 %v138, %v140
    %v142 = vrot.slane %v128, %v141
    %v143 = vcombine.low %v120, %v135
    %v144 = vcombine.high %v120, %v135
    %v146 = vunpack.c.l.s4 1934713408
    %v147 = vunpack.c.0.s8 %v146
    %v148 = vlaneseq
    %v149 = vshrl.u32 %v148, 7
    %v150 = vsub.s32 %v147, %v149
    %v151 = vrot.slane %v143, %v150
    %v153 = vunpack.c.l.s4 1934713408
    %v154 = vunpack.c.0.s8 %v153
    %v155 = vlaneseq
    %v156 = vshrl.u32 %v155, 7
    %v157 = vsub.s32 %v154, %v156
    %v158 = vrot.slane %v144, %v157
    %v159 = vcombine.low %v127, %v142
    %v160 = vcombine.high %v127, %v142
    %v162 = vunpack.c.l.s4 1934713408
    %v163 = vunpack.c.0.s8 %v162
    %v164 = vlaneseq
    %v165 = vshrl.u32 %v164, 7
    %v166 = vsub.s32 %v163, %v165
    %v167 = vrot.slane %v159, %v166
    %v169 = vunpack.c.l.s4 1934713408
    %v170 = vunpack.c.0.s8 %v169
    %v171 = vlaneseq
    %v172 = vshrl.u32 %v171, 7
    %v173 = vsub.s32 %v170, %v172
    %v174 = vrot.slane %v160, %v173
    %v175 = vcombine.high %v151, 0.0
    %v176 = vcombine.high %v158, 0.0
    %v177 = vcombine.high %v167, 0.0
    %v178 = vcombine.high %v174, 0.0
    %v179 = vpack.c.bf16 %v151, %v151
    %v180 = vpack.c.bf16 %v175, %v175
    %v181 = vpack.c.bf16 %v158, %v158
    %v182 = vpack.c.bf16 %v176, %v176
    %v183 = vpack.c.bf16 %v167, %v167
    %v184 = vpack.c.bf16 %v177, %v177
    %v185 = vpack.c.bf16 %v174, %v174
    %v186 = vpack.c.bf16 %v178, %v178
    %v187 = vld [vmem:[%s3] sm:$0xf]
    %v188 = vld [vmem:[%s3 + $0x4] sm:$0xf]
    %v189 = vld [vmem:[%s3 + $0x8] sm:$0xf]
    %v190 = vld [vmem:[%s3 + $0xc] sm:$0xf]
    %v191 = vld [vmem:[%s3 + $0x10] sm:$0xf]
    %v192 = vld [vmem:[%s3 + $0x14] sm:$0xf]
    %v193 = vld [vmem:[%s3 + $0x18] sm:$0xf]
    %v194 = vld [vmem:[%s3 + $0x1c] sm:$0xf]
    %v195 = vld [vmem:[%s3 + $0x20] sm:$0xf]
    %v196 = vld [vmem:[%s3 + $0x24] sm:$0xf]
    %v197 = vld [vmem:[%s3 + $0x28] sm:$0xf]
    %v198 = vld [vmem:[%s3 + $0x2c] sm:$0xf]
    %v199 = vld [vmem:[%s3 + $0x30] sm:$0xf]
    %v200 = vld [vmem:[%s3 + $0x34] sm:$0xf]
    %v201 = vld [vmem:[%s3 + $0x38] sm:$0xf]
    %v202 = vld [vmem:[%s3 + $0x3c] sm:$0xf]
    %v203 = vld [vmem:[%s3 + $0x40] sm:$0xf]
    %v204 = vld [vmem:[%s3 + $0x44] sm:$0xf]
    %v205 = vld [vmem:[%s3 + $0x48] sm:$0xf]
    %v206 = vld [vmem:[%s3 + $0x4c] sm:$0xf]
    %v207 = vld [vmem:[%s3 + $0x50] sm:$0xf]
    %v208 = vld [vmem:[%s3 + $0x54] sm:$0xf]
    %v209 = vld [vmem:[%s3 + $0x58] sm:$0xf]
    %v210 = vld [vmem:[%s3 + $0x5c] sm:$0xf]
    %v211 = vld [vmem:[%s3 + $0x60] sm:$0xf]
    %v212 = vld [vmem:[%s3 + $0x64] sm:$0xf]
    %v213 = vld [vmem:[%s3 + $0x68] sm:$0xf]
    %v214 = vld [vmem:[%s3 + $0x6c] sm:$0xf]
    %v215 = vld [vmem:[%s3 + $0x70] sm:$0xf]
    %v216 = vld [vmem:[%s3 + $0x74] sm:$0xf]
    %v217 = vld [vmem:[%s3 + $0x78] sm:$0xf]
    %v218 = vld [vmem:[%s3 + $0x7c] sm:$0xf]
    %v219 = vld [vmem:[%s3 + $0x80] sm:$0xf]
    %v220 = vld [vmem:[%s3 + $0x84] sm:$0xf]
    %v221 = vld [vmem:[%s3 + $0x88] sm:$0xf]
    %v222 = vld [vmem:[%s3 + $0x8c] sm:$0xf]
    %v223 = vld [vmem:[%s3 + $0x90] sm:$0xf]
    %v224 = vld [vmem:[%s3 + $0x94] sm:$0xf]
    %v225 = vld [vmem:[%s3 + $0x98] sm:$0xf]
    %v226 = vld [vmem:[%s3 + $0x9c] sm:$0xf]
    %v227 = vld [vmem:[%s3 + $0xa0] sm:$0xf]
    %v228 = vld [vmem:[%s3 + $0xa4] sm:$0xf]
    %v229 = vld [vmem:[%s3 + $0xa8] sm:$0xf]
    %v230 = vld [vmem:[%s3 + $0xac] sm:$0xf]
    %v231 = vld [vmem:[%s3 + $0xb0] sm:$0xf]
    %v232 = vld [vmem:[%s3 + $0xb4] sm:$0xf]
    %v233 = vld [vmem:[%s3 + $0xb8] sm:$0xf]
    %v234 = vld [vmem:[%s3 + $0xbc] sm:$0xf]
    %v235 = vld [vmem:[%s3 + $0xc0] sm:$0xf]
    %v236 = vld [vmem:[%s3 + $0xc4] sm:$0xf]
    %v237 = vld [vmem:[%s3 + $0xc8] sm:$0xf]
    %v238 = vld [vmem:[%s3 + $0xcc] sm:$0xf]
    %v239 = vld [vmem:[%s3 + $0xd0] sm:$0xf]
    %v240 = vld [vmem:[%s3 + $0xd4] sm:$0xf]
    %v241 = vld [vmem:[%s3 + $0xd8] sm:$0xf]
    %v242 = vld [vmem:[%s3 + $0xdc] sm:$0xf]
    %v243 = vld [vmem:[%s3 + $0xe0] sm:$0xf]
    %v244 = vld [vmem:[%s3 + $0xe4] sm:$0xf]
    %v245 = vld [vmem:[%s3 + $0xe8] sm:$0xf]
    %v246 = vld [vmem:[%s3 + $0xec] sm:$0xf]
    %v247 = vld [vmem:[%s3 + $0xf0] sm:$0xf]
    %v248 = vld [vmem:[%s3 + $0xf4] sm:$0xf]
    %v249 = vld [vmem:[%s3 + $0xf8] sm:$0xf]
    %v250 = vld [vmem:[%s3 + $0xfc] sm:$0xf]
    %v251 = vld [vmem:[%s3 + $0x100] sm:$0xf]
    %v252 = vld [vmem:[%s3 + $0x104] sm:$0xf]
    %v253 = vld [vmem:[%s3 + $0x108] sm:$0xf]
    %v254 = vld [vmem:[%s3 + $0x10c] sm:$0xf]
    %v255 = vld [vmem:[%s3 + $0x110] sm:$0xf]
    %v256 = vld [vmem:[%s3 + $0x114] sm:$0xf]
    %v257 = vld [vmem:[%s3 + $0x118] sm:$0xf]
    %v258 = vld [vmem:[%s3 + $0x11c] sm:$0xf]
    %v259 = vld [vmem:[%s3 + $0x120] sm:$0xf]
    %v260 = vld [vmem:[%s3 + $0x124] sm:$0xf]
    %v261 = vld [vmem:[%s3 + $0x128] sm:$0xf]
    %v262 = vld [vmem:[%s3 + $0x12c] sm:$0xf]
    %v263 = vld [vmem:[%s3 + $0x130] sm:$0xf]
    %v264 = vld [vmem:[%s3 + $0x134] sm:$0xf]
    %v265 = vld [vmem:[%s3 + $0x138] sm:$0xf]
    %v266 = vld [vmem:[%s3 + $0x13c] sm:$0xf]
    %v267 = vld [vmem:[%s3 + $0x140] sm:$0xf]
    %v268 = vld [vmem:[%s3 + $0x144] sm:$0xf]
    %v269 = vld [vmem:[%s3 + $0x148] sm:$0xf]
    %v270 = vld [vmem:[%s3 + $0x14c] sm:$0xf]
    %v271 = vld [vmem:[%s3 + $0x150] sm:$0xf]
    %v272 = vld [vmem:[%s3 + $0x154] sm:$0xf]
    %v273 = vld [vmem:[%s3 + $0x158] sm:$0xf]
    %v274 = vld [vmem:[%s3 + $0x15c] sm:$0xf]
    %v275 = vld [vmem:[%s3 + $0x160] sm:$0xf]
    %v276 = vld [vmem:[%s3 + $0x164] sm:$0xf]
    %v277 = vld [vmem:[%s3 + $0x168] sm:$0xf]
    %v278 = vld [vmem:[%s3 + $0x16c] sm:$0xf]
    %v279 = vld [vmem:[%s3 + $0x170] sm:$0xf]
    %v280 = vld [vmem:[%s3 + $0x174] sm:$0xf]
    %v281 = vld [vmem:[%s3 + $0x178] sm:$0xf]
    %v282 = vld [vmem:[%s3 + $0x17c] sm:$0xf]
    %v283 = vld [vmem:[%s3 + $0x180] sm:$0xf]
    %v284 = vld [vmem:[%s3 + $0x184] sm:$0xf]
    %v285 = vld [vmem:[%s3 + $0x188] sm:$0xf]
    %v286 = vld [vmem:[%s3 + $0x18c] sm:$0xf]
    %v287 = vld [vmem:[%s3 + $0x190] sm:$0xf]
    %v288 = vld [vmem:[%s3 + $0x194] sm:$0xf]
    %v289 = vld [vmem:[%s3 + $0x198] sm:$0xf]
    %v290 = vld [vmem:[%s3 + $0x19c] sm:$0xf]
    %v291 = vld [vmem:[%s3 + $0x1a0] sm:$0xf]
    %v292 = vld [vmem:[%s3 + $0x1a4] sm:$0xf]
    %v293 = vld [vmem:[%s3 + $0x1a8] sm:$0xf]
    %v294 = vld [vmem:[%s3 + $0x1ac] sm:$0xf]
    %v295 = vld [vmem:[%s3 + $0x1b0] sm:$0xf]
    %v296 = vld [vmem:[%s3 + $0x1b4] sm:$0xf]
    %v297 = vld [vmem:[%s3 + $0x1b8] sm:$0xf]
    %v298 = vld [vmem:[%s3 + $0x1bc] sm:$0xf]
    %v299 = vld [vmem:[%s3 + $0x1c0] sm:$0xf]
    %v300 = vld [vmem:[%s3 + $0x1c4] sm:$0xf]
    %v301 = vld [vmem:[%s3 + $0x1c8] sm:$0xf]
    %v302 = vld [vmem:[%s3 + $0x1cc] sm:$0xf]
    %v303 = vld [vmem:[%s3 + $0x1d0] sm:$0xf]
    %v304 = vld [vmem:[%s3 + $0x1d4] sm:$0xf]
    %v305 = vld [vmem:[%s3 + $0x1d8] sm:$0xf]
    %v306 = vld [vmem:[%s3 + $0x1dc] sm:$0xf]
    %v307 = vld [vmem:[%s3 + $0x1e0] sm:$0xf]
    %v308 = vld [vmem:[%s3 + $0x1e4] sm:$0xf]
    %v309 = vld [vmem:[%s3 + $0x1e8] sm:$0xf]
    %v310 = vld [vmem:[%s3 + $0x1ec] sm:$0xf]
    %v311 = vld [vmem:[%s3 + $0x1f0] sm:$0xf]
    %v312 = vld [vmem:[%s3 + $0x1f4] sm:$0xf]
    %v313 = vld [vmem:[%s3 + $0x1f8] sm:$0xf]
    %v314 = vld [vmem:[%s3 + $0x1fc] sm:$0xf]
    %v331 = vunpack.c.l.b16 %v187
    %v332 = vunpack.c.l.b16 %v188
    %v333 = vunpack.c.l.b16 %v189
    %v334 = vunpack.c.l.b16 %v190
    %v335 = vunpack.c.l.b16 %v191
    %v336 = vunpack.c.l.b16 %v192
    %v337 = vunpack.c.l.b16 %v193
    %v338 = vunpack.c.l.b16 %v194
    %v339 = vunpack.c.l.b16 %v195
    %v340 = vunpack.c.l.b16 %v196
    %v341 = vunpack.c.l.b16 %v197
    %v342 = vunpack.c.l.b16 %v198
    %v343 = vunpack.c.l.b16 %v199
    %v344 = vunpack.c.l.b16 %v200
    %v345 = vunpack.c.l.b16 %v201
    %v346 = vunpack.c.l.b16 %v202
    %v347 = vpack.c.b16 %v332, %v331
    %v348 = vpack.c.b16 %v334, %v333
    %v349 = vpack.c.b16 %v336, %v335
    %v350 = vpack.c.b16 %v338, %v337
    %v351 = vpack.c.b16 %v340, %v339
    %v352 = vpack.c.b16 %v342, %v341
    %v353 = vpack.c.b16 %v344, %v343
    %v354 = vpack.c.b16 %v346, %v345
    %363 = vmatprep.subr.bf16.mxu0 0
    %364 = vmatpush1.bf16.msra.mxu0 %v347
    %365 = vmatprep.subr.bf16.mxu0 0
    %366 = vmatpush1.bf16.msra.mxu0 %v348
    %367 = vmatprep.subr.bf16.mxu0 0
    %368 = vmatpush1.bf16.msra.mxu0 %v349
    %369 = vmatprep.subr.bf16.mxu0 0
    %370 = vmatpush1.bf16.msra.mxu0 %v350
    %371 = vmatprep.subr.bf16.mxu0 0
    %372 = vmatpush1.bf16.msra.mxu0 %v351
    %373 = vmatprep.subr.bf16.mxu0 0
    %374 = vmatpush1.bf16.msra.mxu0 %v352
    %375 = vmatprep.subr.bf16.mxu0 0
    %376 = vmatpush1.bf16.msra.mxu0 %v353
    %377 = vmatprep.subr.bf16.mxu0 0
    %378 = vmatpush1.bf16.msra.mxu0 %v354
    %379 = vmatprep.subr.bf16.mxu0 0
    %380 = vmatpush1.bf16.msra.mxu0 0
    %381 = vmatprep.subr.bf16.mxu0 0
    %382 = vmatpush1.bf16.msra.mxu0 0
    %383 = vmatprep.subr.bf16.mxu0 0
    %384 = vmatpush1.bf16.msra.mxu0 0
    %385 = vmatprep.subr.bf16.mxu0 0
    %386 = vmatpush1.bf16.msra.mxu0 0
    %387 = vmatprep.subr.bf16.mxu0 0
    %388 = vmatpush1.bf16.msra.mxu0 0
    %389 = vmatprep.subr.bf16.mxu0 0
    %390 = vmatpush1.bf16.msra.mxu0 0
    %391 = vmatprep.subr.bf16.mxu0 0
    %392 = vmatpush1.bf16.msra.mxu0 0
    %393 = vmatprep.subr.bf16.mxu0 0
    %394 = vmatpush1.bf16.msra.mxu0 0
    %395 = vmatprep.mubr.bf16.mxu0 0
    %396 = vmatmul.mubr.bf16.gmra.mrb[0].mxu0 %v179
    %v397 = vpop.f32.mrb[0].mxu0
    %v398 = vadd.f32 0.0, %v397
    %v399 = vpop.f32.mrb[0].mxu0
    %v400 = vpop.f32.mrb[0].mxu0
    %v401 = vpop.f32.mrb[0].mxu0
    %402 = vdwg.mxu0
    %v419 = vunpack.c.l.b16 %v203
    %v420 = vunpack.c.l.b16 %v204
    %v421 = vunpack.c.l.b16 %v205
    %v422 = vunpack.c.l.b16 %v206
    %v423 = vunpack.c.l.b16 %v207
    %v424 = vunpack.c.l.b16 %v208
    %v425 = vunpack.c.l.b16 %v209
    %v426 = vunpack.c.l.b16 %v210
    %v427 = vunpack.c.l.b16 %v211
    %v428 = vunpack.c.l.b16 %v212
    %v429 = vunpack.c.l.b16 %v213
    %v430 = vunpack.c.l.b16 %v214
    %v431 = vunpack.c.l.b16 %v215
    %v432 = vunpack.c.l.b16 %v216
    %v433 = vunpack.c.l.b16 %v217
    %v434 = vunpack.c.l.b16 %v218
    %v435 = vpack.c.b16 %v420, %v419
    %v436 = vpack.c.b16 %v422, %v421
    %v437 = vpack.c.b16 %v424, %v423
    %v438 = vpack.c.b16 %v426, %v425
    %v439 = vpack.c.b16 %v428, %v427
    %v440 = vpack.c.b16 %v430, %v429
    %v441 = vpack.c.b16 %v432, %v431
    %v442 = vpack.c.b16 %v434, %v433
    %451 = vmatprep.subr.bf16.mxu0 0
    %452 = vmatpush1.bf16.msra.mxu0 %v435
    %453 = vmatprep.subr.bf16.mxu0 0
    %454 = vmatpush1.bf16.msra.mxu0 %v436
    %455 = vmatprep.subr.bf16.mxu0 0
    %456 = vmatpush1.bf16.msra.mxu0 %v437
    %457 = vmatprep.subr.bf16.mxu0 0
    %458 = vmatpush1.bf16.msra.mxu0 %v438
    %459 = vmatprep.subr.bf16.mxu0 0
    %460 = vmatpush1.bf16.msra.mxu0 %v439
    %461 = vmatprep.subr.bf16.mxu0 0
    %462 = vmatpush1.bf16.msra.mxu0 %v440
    %463 = vmatprep.subr.bf16.mxu0 0
    %464 = vmatpush1.bf16.msra.mxu0 %v441
    %465 = vmatprep.subr.bf16.mxu0 0
    %466 = vmatpush1.bf16.msra.mxu0 %v442
    %467 = vmatprep.subr.bf16.mxu0 0
    %468 = vmatpush1.bf16.msra.mxu0 0
    %469 = vmatprep.subr.bf16.mxu0 0
    %470 = vmatpush1.bf16.msra.mxu0 0
    %471 = vmatprep.subr.bf16.mxu0 0
    %472 = vmatpush1.bf16.msra.mxu0 0
    %473 = vmatprep.subr.bf16.mxu0 0
    %474 = vmatpush1.bf16.msra.mxu0 0
    %475 = vmatprep.subr.bf16.mxu0 0
    %476 = vmatpush1.bf16.msra.mxu0 0
    %477 = vmatprep.subr.bf16.mxu0 0
    %478 = vmatpush1.bf16.msra.mxu0 0
    %479 = vmatprep.subr.bf16.mxu0 0
    %480 = vmatpush1.bf16.msra.mxu0 0
    %481 = vmatprep.subr.bf16.mxu0 0
    %482 = vmatpush1.bf16.msra.mxu0 0
    %483 = vmatprep.mubr.bf16.mxu0 0
    %484 = vmatmul.mubr.bf16.gmra.mrb[0].mxu0 %v180
    %v485 = vpop.f32.mrb[0].mxu0
    %v486 = vadd.f32 0.0, %v485
    %v487 = vpop.f32.mrb[0].mxu0
    %v488 = vpop.f32.mrb[0].mxu0
    %v489 = vpop.f32.mrb[0].mxu0
    %490 = vdwg.mxu0
    %v507 = vunpack.c.l.b16 %v219
    %v508 = vunpack.c.l.b16 %v220
    %v509 = vunpack.c.l.b16 %v221
    %v510 = vunpack.c.l.b16 %v222
    %v511 = vunpack.c.l.b16 %v223
    %v512 = vunpack.c.l.b16 %v224
    %v513 = vunpack.c.l.b16 %v225
    %v514 = vunpack.c.l.b16 %v226
    %v515 = vunpack.c.l.b16 %v227
    %v516 = vunpack.c.l.b16 %v228
    %v517 = vunpack.c.l.b16 %v229
    %v518 = vunpack.c.l.b16 %v230
    %v519 = vunpack.c.l.b16 %v231
    %v520 = vunpack.c.l.b16 %v232
    %v521 = vunpack.c.l.b16 %v233
    %v522 = vunpack.c.l.b16 %v234
    %v523 = vpack.c.b16 %v508, %v507
    %v524 = vpack.c.b16 %v510, %v509
    %v525 = vpack.c.b16 %v512, %v511
    %v526 = vpack.c.b16 %v514, %v513
    %v527 = vpack.c.b16 %v516, %v515
    %v528 = vpack.c.b16 %v518, %v517
    %v529 = vpack.c.b16 %v520, %v519
    %v530 = vpack.c.b16 %v522, %v521
    %539 = vmatprep.subr.bf16.mxu0 0
    %540 = vmatpush1.bf16.msra.mxu0 %v523
    %541 = vmatprep.subr.bf16.mxu0 0
    %542 = vmatpush1.bf16.msra.mxu0 %v524
    %543 = vmatprep.subr.bf16.mxu0 0
    %544 = vmatpush1.bf16.msra.mxu0 %v525
    %545 = vmatprep.subr.bf16.mxu0 0
    %546 = vmatpush1.bf16.msra.mxu0 %v526
    %547 = vmatprep.subr.bf16.mxu0 0
    %548 = vmatpush1.bf16.msra.mxu0 %v527
    %549 = vmatprep.subr.bf16.mxu0 0
    %550 = vmatpush1.bf16.msra.mxu0 %v528
    %551 = vmatprep.subr.bf16.mxu0 0
    %552 = vmatpush1.bf16.msra.mxu0 %v529
    %553 = vmatprep.subr.bf16.mxu0 0
    %554 = vmatpush1.bf16.msra.mxu0 %v530
    %555 = vmatprep.subr.bf16.mxu0 0
    %556 = vmatpush1.bf16.msra.mxu0 0
    %557 = vmatprep.subr.bf16.mxu0 0
    %558 = vmatpush1.bf16.msra.mxu0 0
    %559 = vmatprep.subr.bf16.mxu0 0
    %560 = vmatpush1.bf16.msra.mxu0 0
    %561 = vmatprep.subr.bf16.mxu0 0
    %562 = vmatpush1.bf16.msra.mxu0 0
    %563 = vmatprep.subr.bf16.mxu0 0
    %564 = vmatpush1.bf16.msra.mxu0 0
    %565 = vmatprep.subr.bf16.mxu0 0
    %566 = vmatpush1.bf16.msra.mxu0 0
    %567 = vmatprep.subr.bf16.mxu0 0
    %568 = vmatpush1.bf16.msra.mxu0 0
    %569 = vmatprep.subr.bf16.mxu0 0
    %570 = vmatpush1.bf16.msra.mxu0 0
    %571 = vmatprep.mubr.bf16.mxu0 0
    %572 = vmatmul.mubr.bf16.gmra.mrb[0].mxu0 %v181
    %v573 = vpop.f32.mrb[0].mxu0
    %v574 = vadd.f32 0.0, %v573
    %v575 = vpop.f32.mrb[0].mxu0
    %v576 = vpop.f32.mrb[0].mxu0
    %v577 = vpop.f32.mrb[0].mxu0
    %578 = vdwg.mxu0
    %v595 = vunpack.c.l.b16 %v235
    %v596 = vunpack.c.l.b16 %v236
    %v597 = vunpack.c.l.b16 %v237
    %v598 = vunpack.c.l.b16 %v238
    %v599 = vunpack.c.l.b16 %v239
    %v600 = vunpack.c.l.b16 %v240
    %v601 = vunpack.c.l.b16 %v241
    %v602 = vunpack.c.l.b16 %v242
    %v603 = vunpack.c.l.b16 %v243
    %v604 = vunpack.c.l.b16 %v244
    %v605 = vunpack.c.l.b16 %v245
    %v606 = vunpack.c.l.b16 %v246
    %v607 = vunpack.c.l.b16 %v247
    %v608 = vunpack.c.l.b16 %v248
    %v609 = vunpack.c.l.b16 %v249
    %v610 = vunpack.c.l.b16 %v250
    %v611 = vpack.c.b16 %v596, %v595
    %v612 = vpack.c.b16 %v598, %v597
    %v613 = vpack.c.b16 %v600, %v599
    %v614 = vpack.c.b16 %v602, %v601
    %v615 = vpack.c.b16 %v604, %v603
    %v616 = vpack.c.b16 %v606, %v605
    %v617 = vpack.c.b16 %v608, %v607
    %v618 = vpack.c.b16 %v610, %v609
    %627 = vmatprep.subr.bf16.mxu0 0
    %628 = vmatpush1.bf16.msra.mxu0 %v611
    %629 = vmatprep.subr.bf16.mxu0 0
    %630 = vmatpush1.bf16.msra.mxu0 %v612
    %631 = vmatprep.subr.bf16.mxu0 0
    %632 = vmatpush1.bf16.msra.mxu0 %v613
    %633 = vmatprep.subr.bf16.mxu0 0
    %634 = vmatpush1.bf16.msra.mxu0 %v614
    %635 = vmatprep.subr.bf16.mxu0 0
    %636 = vmatpush1.bf16.msra.mxu0 %v615
    %637 = vmatprep.subr.bf16.mxu0 0
    %638 = vmatpush1.bf16.msra.mxu0 %v616
    %639 = vmatprep.subr.bf16.mxu0 0
    %640 = vmatpush1.bf16.msra.mxu0 %v617
    %641 = vmatprep.subr.bf16.mxu0 0
    %642 = vmatpush1.bf16.msra.mxu0 %v618
    %643 = vmatprep.subr.bf16.mxu0 0
    %644 = vmatpush1.bf16.msra.mxu0 0
    %645 = vmatprep.subr.bf16.mxu0 0
    %646 = vmatpush1.bf16.msra.mxu0 0
    %647 = vmatprep.subr.bf16.mxu0 0
    %648 = vmatpush1.bf16.msra.mxu0 0
    %649 = vmatprep.subr.bf16.mxu0 0
    %650 = vmatpush1.bf16.msra.mxu0 0
    %651 = vmatprep.subr.bf16.mxu0 0
    %652 = vmatpush1.bf16.msra.mxu0 0
    %653 = vmatprep.subr.bf16.mxu0 0
    %654 = vmatpush1.bf16.msra.mxu0 0
    %655 = vmatprep.subr.bf16.mxu0 0
    %656 = vmatpush1.bf16.msra.mxu0 0
    %657 = vmatprep.subr.bf16.mxu0 0
    %658 = vmatpush1.bf16.msra.mxu0 0
    %659 = vmatprep.mubr.bf16.mxu0 0
    %660 = vmatmul.mubr.bf16.gmra.mrb[0].mxu0 %v182
    %v661 = vpop.f32.mrb[0].mxu0
    %v662 = vadd.f32 0.0, %v661
    %v663 = vpop.f32.mrb[0].mxu0
    %v664 = vpop.f32.mrb[0].mxu0
    %v665 = vpop.f32.mrb[0].mxu0
    %666 = vdwg.mxu0
    %v683 = vunpack.c.l.b16 %v251
    %v684 = vunpack.c.l.b16 %v252
    %v685 = vunpack.c.l.b16 %v253
    %v686 = vunpack.c.l.b16 %v254
    %v687 = vunpack.c.l.b16 %v255
    %v688 = vunpack.c.l.b16 %v256
    %v689 = vunpack.c.l.b16 %v257
    %v690 = vunpack.c.l.b16 %v258
    %v691 = vunpack.c.l.b16 %v259
    %v692 = vunpack.c.l.b16 %v260
    %v693 = vunpack.c.l.b16 %v261
    %v694 = vunpack.c.l.b16 %v262
    %v695 = vunpack.c.l.b16 %v263
    %v696 = vunpack.c.l.b16 %v264
    %v697 = vunpack.c.l.b16 %v265
    %v698 = vunpack.c.l.b16 %v266
    %v699 = vpack.c.b16 %v684, %v683
    %v700 = vpack.c.b16 %v686, %v685
    %v701 = vpack.c.b16 %v688, %v687
    %v702 = vpack.c.b16 %v690, %v689
    %v703 = vpack.c.b16 %v692, %v691
    %v704 = vpack.c.b16 %v694, %v693
    %v705 = vpack.c.b16 %v696, %v695
    %v706 = vpack.c.b16 %v698, %v697
    %715 = vmatprep.subr.bf16.mxu0 0
    %716 = vmatpush1.bf16.msra.mxu0 %v699
    %717 = vmatprep.subr.bf16.mxu0 0
    %718 = vmatpush1.bf16.msra.mxu0 %v700
    %719 = vmatprep.subr.bf16.mxu0 0
    %720 = vmatpush1.bf16.msra.mxu0 %v701
    %721 = vmatprep.subr.bf16.mxu0 0
    %722 = vmatpush1.bf16.msra.mxu0 %v702
    %723 = vmatprep.subr.bf16.mxu0 0
    %724 = vmatpush1.bf16.msra.mxu0 %v703
    %725 = vmatprep.subr.bf16.mxu0 0
    %726 = vmatpush1.bf16.msra.mxu0 %v704
    %727 = vmatprep.subr.bf16.mxu0 0
    %728 = vmatpush1.bf16.msra.mxu0 %v705
    %729 = vmatprep.subr.bf16.mxu0 0
    %730 = vmatpush1.bf16.msra.mxu0 %v706
    %731 = vmatprep.subr.bf16.mxu0 0
    %732 = vmatpush1.bf16.msra.mxu0 0
    %733 = vmatprep.subr.bf16.mxu0 0
    %734 = vmatpush1.bf16.msra.mxu0 0
    %735 = vmatprep.subr.bf16.mxu0 0
    %736 = vmatpush1.bf16.msra.mxu0 0
    %737 = vmatprep.subr.bf16.mxu0 0
    %738 = vmatpush1.bf16.msra.mxu0 0
    %739 = vmatprep.subr.bf16.mxu0 0
    %740 = vmatpush1.bf16.msra.mxu0 0
    %741 = vmatprep.subr.bf16.mxu0 0
    %742 = vmatpush1.bf16.msra.mxu0 0
    %743 = vmatprep.subr.bf16.mxu0 0
    %744 = vmatpush1.bf16.msra.mxu0 0
    %745 = vmatprep.subr.bf16.mxu0 0
    %746 = vmatpush1.bf16.msra.mxu0 0
    %747 = vmatprep.mubr.bf16.mxu0 0
    %748 = vmatmul.mubr.bf16.gmra.mrb[0].mxu0 %v183
    %v749 = vpop.f32.mrb[0].mxu0
    %v750 = vadd.f32 0.0, %v749
    %v751 = vpop.f32.mrb[0].mxu0
    %v752 = vpop.f32.mrb[0].mxu0
    %v753 = vpop.f32.mrb[0].mxu0
    %754 = vdwg.mxu0
    %v771 = vunpack.c.l.b16 %v267
    %v772 = vunpack.c.l.b16 %v268
    %v773 = vunpack.c.l.b16 %v269
    %v774 = vunpack.c.l.b16 %v270
    %v775 = vunpack.c.l.b16 %v271
    %v776 = vunpack.c.l.b16 %v272
    %v777 = vunpack.c.l.b16 %v273
    %v778 = vunpack.c.l.b16 %v274
    %v779 = vunpack.c.l.b16 %v275
    %v780 = vunpack.c.l.b16 %v276
    %v781 = vunpack.c.l.b16 %v277
    %v782 = vunpack.c.l.b16 %v278
    %v783 = vunpack.c.l.b16 %v279
    %v784 = vunpack.c.l.b16 %v280
    %v785 = vunpack.c.l.b16 %v281
    %v786 = vunpack.c.l.b16 %v282
    %v787 = vpack.c.b16 %v772, %v771
    %v788 = vpack.c.b16 %v774, %v773
    %v789 = vpack.c.b16 %v776, %v775
    %v790 = vpack.c.b16 %v778, %v777
    %v791 = vpack.c.b16 %v780, %v779
    %v792 = vpack.c.b16 %v782, %v781
    %v793 = vpack.c.b16 %v784, %v783
    %v794 = vpack.c.b16 %v786, %v785
    %803 = vmatprep.subr.bf16.mxu0 0
    %804 = vmatpush1.bf16.msra.mxu0 %v787
    %805 = vmatprep.subr.bf16.mxu0 0
    %806 = vmatpush1.bf16.msra.mxu0 %v788
    %807 = vmatprep.subr.bf16.mxu0 0
    %808 = vmatpush1.bf16.msra.mxu0 %v789
    %809 = vmatprep.subr.bf16.mxu0 0
    %810 = vmatpush1.bf16.msra.mxu0 %v790
    %811 = vmatprep.subr.bf16.mxu0 0
    %812 = vmatpush1.bf16.msra.mxu0 %v791
    %813 = vmatprep.subr.bf16.mxu0 0
    %814 = vmatpush1.bf16.msra.mxu0 %v792
    %815 = vmatprep.subr.bf16.mxu0 0
    %816 = vmatpush1.bf16.msra.mxu0 %v793
    %817 = vmatprep.subr.bf16.mxu0 0
    %818 = vmatpush1.bf16.msra.mxu0 %v794
    %819 = vmatprep.subr.bf16.mxu0 0
    %820 = vmatpush1.bf16.msra.mxu0 0
    %821 = vmatprep.subr.bf16.mxu0 0
    %822 = vmatpush1.bf16.msra.mxu0 0
    %823 = vmatprep.subr.bf16.mxu0 0
    %824 = vmatpush1.bf16.msra.mxu0 0
    %825 = vmatprep.subr.bf16.mxu0 0
    %826 = vmatpush1.bf16.msra.mxu0 0
    %827 = vmatprep.subr.bf16.mxu0 0
    %828 = vmatpush1.bf16.msra.mxu0 0
    %829 = vmatprep.subr.bf16.mxu0 0
    %830 = vmatpush1.bf16.msra.mxu0 0
    %831 = vmatprep.subr.bf16.mxu0 0
    %832 = vmatpush1.bf16.msra.mxu0 0
    %833 = vmatprep.subr.bf16.mxu0 0
    %834 = vmatpush1.bf16.msra.mxu0 0
    %835 = vmatprep.mubr.bf16.mxu0 0
    %836 = vmatmul.mubr.bf16.gmra.mrb[0].mxu0 %v184
    %v837 = vpop.f32.mrb[0].mxu0
    %v838 = vadd.f32 0.0, %v837
    %v839 = vpop.f32.mrb[0].mxu0
    %v840 = vpop.f32.mrb[0].mxu0
    %v841 = vpop.f32.mrb[0].mxu0
    %842 = vdwg.mxu0
    %v859 = vunpack.c.l.b16 %v283
    %v860 = vunpack.c.l.b16 %v284
    %v861 = vunpack.c.l.b16 %v285
    %v862 = vunpack.c.l.b16 %v286
    %v863 = vunpack.c.l.b16 %v287
    %v864 = vunpack.c.l.b16 %v288
    %v865 = vunpack.c.l.b16 %v289
    %v866 = vunpack.c.l.b16 %v290
    %v867 = vunpack.c.l.b16 %v291
    %v868 = vunpack.c.l.b16 %v292
    %v869 = vunpack.c.l.b16 %v293
    %v870 = vunpack.c.l.b16 %v294
    %v871 = vunpack.c.l.b16 %v295
    %v872 = vunpack.c.l.b16 %v296
    %v873 = vunpack.c.l.b16 %v297
    %v874 = vunpack.c.l.b16 %v298
    %v875 = vpack.c.b16 %v860, %v859
    %v876 = vpack.c.b16 %v862, %v861
    %v877 = vpack.c.b16 %v864, %v863
    %v878 = vpack.c.b16 %v866, %v865
    %v879 = vpack.c.b16 %v868, %v867
    %v880 = vpack.c.b16 %v870, %v869
    %v881 = vpack.c.b16 %v872, %v871
    %v882 = vpack.c.b16 %v874, %v873
    %891 = vmatprep.subr.bf16.mxu0 0
    %892 = vmatpush1.bf16.msra.mxu0 %v875
    %893 = vmatprep.subr.bf16.mxu0 0
    %894 = vmatpush1.bf16.msra.mxu0 %v876
    %895 = vmatprep.subr.bf16.mxu0 0
    %896 = vmatpush1.bf16.msra.mxu0 %v877
    %897 = vmatprep.subr.bf16.mxu0 0
    %898 = vmatpush1.bf16.msra.mxu0 %v878
    %899 = vmatprep.subr.bf16.mxu0 0
    %900 = vmatpush1.bf16.msra.mxu0 %v879
    %901 = vmatprep.subr.bf16.mxu0 0
    %902 = vmatpush1.bf16.msra.mxu0 %v880
    %903 = vmatprep.subr.bf16.mxu0 0
    %904 = vmatpush1.bf16.msra.mxu0 %v881
    %905 = vmatprep.subr.bf16.mxu0 0
    %906 = vmatpush1.bf16.msra.mxu0 %v882
    %907 = vmatprep.subr.bf16.mxu0 0
    %908 = vmatpush1.bf16.msra.mxu0 0
    %909 = vmatprep.subr.bf16.mxu0 0
    %910 = vmatpush1.bf16.msra.mxu0 0
    %911 = vmatprep.subr.bf16.mxu0 0
    %912 = vmatpush1.bf16.msra.mxu0 0
    %913 = vmatprep.subr.bf16.mxu0 0
    %914 = vmatpush1.bf16.msra.mxu0 0
    %915 = vmatprep.subr.bf16.mxu0 0
    %916 = vmatpush1.bf16.msra.mxu0 0
    %917 = vmatprep.subr.bf16.mxu0 0
    %918 = vmatpush1.bf16.msra.mxu0 0
    %919 = vmatprep.subr.bf16.mxu0 0
    %920 = vmatpush1.bf16.msra.mxu0 0
    %921 = vmatprep.subr.bf16.mxu0 0
    %922 = vmatpush1.bf16.msra.mxu0 0
    %923 = vmatprep.mubr.bf16.mxu0 0
    %924 = vmatmul.mubr.bf16.gmra.mrb[0].mxu0 %v185
    %v925 = vpop.f32.mrb[0].mxu0
    %v926 = vadd.f32 0.0, %v925
    %v927 = vpop.f32.mrb[0].mxu0
    %v928 = vpop.f32.mrb[0].mxu0
    %v929 = vpop.f32.mrb[0].mxu0
    %930 = vdwg.mxu0
    %v947 = vunpack.c.l.b16 %v299
    %v948 = vunpack.c.l.b16 %v300
    %v949 = vunpack.c.l.b16 %v301
    %v950 = vunpack.c.l.b16 %v302
    %v951 = vunpack.c.l.b16 %v303
    %v952 = vunpack.c.l.b16 %v304
    %v953 = vunpack.c.l.b16 %v305
    %v954 = vunpack.c.l.b16 %v306
    %v955 = vunpack.c.l.b16 %v307
    %v956 = vunpack.c.l.b16 %v308
    %v957 = vunpack.c.l.b16 %v309
    %v958 = vunpack.c.l.b16 %v310
    %v959 = vunpack.c.l.b16 %v311
    %v960 = vunpack.c.l.b16 %v312
    %v961 = vunpack.c.l.b16 %v313
    %v962 = vunpack.c.l.b16 %v314
    %v963 = vpack.c.b16 %v948, %v947
    %v964 = vpack.c.b16 %v950, %v949
    %v965 = vpack.c.b16 %v952, %v951
    %v966 = vpack.c.b16 %v954, %v953
    %v967 = vpack.c.b16 %v956, %v955
    %v968 = vpack.c.b16 %v958, %v957
    %v969 = vpack.c.b16 %v960, %v959
    %v970 = vpack.c.b16 %v962, %v961
    %979 = vmatprep.subr.bf16.mxu0 0
    %980 = vmatpush1.bf16.msra.mxu0 %v963
    %981 = vmatprep.subr.bf16.mxu0 0
    %982 = vmatpush1.bf16.msra.mxu0 %v964
    %983 = vmatprep.subr.bf16.mxu0 0
    %984 = vmatpush1.bf16.msra.mxu0 %v965
    %985 = vmatprep.subr.bf16.mxu0 0
    %986 = vmatpush1.bf16.msra.mxu0 %v966
    %987 = vmatprep.subr.bf16.mxu0 0
    %988 = vmatpush1.bf16.msra.mxu0 %v967
    %989 = vmatprep.subr.bf16.mxu0 0
    %990 = vmatpush1.bf16.msra.mxu0 %v968
    %991 = vmatprep.subr.bf16.mxu0 0
    %992 = vmatpush1.bf16.msra.mxu0 %v969
    %993 = vmatprep.subr.bf16.mxu0 0
    %994 = vmatpush1.bf16.msra.mxu0 %v970
    %995 = vmatprep.subr.bf16.mxu0 0
    %996 = vmatpush1.bf16.msra.mxu0 0
    %997 = vmatprep.subr.bf16.mxu0 0
    %998 = vmatpush1.bf16.msra.mxu0 0
    %999 = vmatprep.subr.bf16.mxu0 0
    %1000 = vmatpush1.bf16.msra.mxu0 0
    %1001 = vmatprep.subr.bf16.mxu0 0
    %1002 = vmatpush1.bf16.msra.mxu0 0
    %1003 = vmatprep.subr.bf16.mxu0 0
    %1004 = vmatpush1.bf16.msra.mxu0 0
    %1005 = vmatprep.subr.bf16.mxu0 0
    %1006 = vmatpush1.bf16.msra.mxu0 0
    %1007 = vmatprep.subr.bf16.mxu0 0
    %1008 = vmatpush1.bf16.msra.mxu0 0
    %1009 = vmatprep.subr.bf16.mxu0 0
    %1010 = vmatpush1.bf16.msra.mxu0 0
    %1011 = vmatprep.mubr.bf16.mxu0 0
    %1012 = vmatmul.mubr.bf16.gmra.mrb[0].mxu0 %v186
    %v1013 = vpop.f32.mrb[0].mxu0
    %v1014 = vadd.f32 0.0, %v1013
    %v1015 = vpop.f32.mrb[0].mxu0
    %v1016 = vpop.f32.mrb[0].mxu0
    %v1017 = vpop.f32.mrb[0].mxu0
    %1018 = vdwg.mxu0
    %v1019 = vsel %vm63, %v398, 0.0
    %v1020 = vsel %vm63, %v486, 0.0
    %v1021 = vadd.f32 %v1019, %v1020
    %v1022 = vsel %vm63, %v574, 0.0
    %v1023 = vadd.f32 %v1021, %v1022
    %v1024 = vsel %vm63, %v662, 0.0
    %v1025 = vadd.f32 %v1023, %v1024
    %v1026 = vsel %vm63, %v750, 0.0
    %v1027 = vadd.f32 %v1025, %v1026
    %v1028 = vsel %vm63, %v838, 0.0
    %v1029 = vadd.f32 %v1027, %v1028
    %v1030 = vsel %vm63, %v926, 0.0
    %v1031 = vadd.f32 %v1029, %v1030
    %v1032 = vsel %vm63, %v1014, 0.0
    %v1033 = vadd.f32 %v1031, %v1032
    %v1034 = vld [vmem:[%s4] sm:$0x1]
    %v1036 = vlaneseq
    %v1037 = vshrl.u32 %v1036, 7
    %v1038 = vsub.s32 0, %v1037
    %v1039 = vrot.slane %v1034, %v1038
    %v1041 = vadd.f32 %v1033, %v1039
    %v1042 = vtanh.pop %v1041
    %1043 = vst [vmem:[#allocation2] sm:$0x3] %v1042
    // Predicated region
    $region22: #{mlp_actor_forward.1} parent=1 // pred_check
      _
    $region23: #{mlp_actor_forward.1} parent=1 // pred_check_branch
      %1045 = sbr.rel (0) target = $region25
    $region24: #{mlp_actor_forward.1} parent=1 // pred_region
      %s1047 = ssub.s32 32, 32
      %1048 = vsyncadd [#allocation3], %s1047
      %s1050 = sshll.u32 [#allocation2], 4
      %s1051 = int_to_ptr.vmem [resolvable:$true] %s1050
      %1053 = dma.vmem_to_hbm [thread:$0]  %s1051, 32, %s5, [#allocation3]
    $region25: #{mlp_actor_forward.1} parent=1 // pred_fallthru
      _
    // Predicated region
    $region26: #{mlp_actor_forward.1} parent=1 // pred_check
      _
    $region27: #{mlp_actor_forward.1} parent=1 // pred_check_branch
      %1055 = sbr.rel (0) target = $region29
    $region28: #{mlp_actor_forward.1} parent=1 // pred_region
      %1056 = dma.done [#allocation3], 32
    $region29: #{mlp_actor_forward.1} parent=1 // pred_fallthru
      _
    %1057 = vsyncpa [#allocation3], 1

</llo_original>
